<compile_context>
chip_gen: v7x
topology: tpu7x:2x2x1
jax: 0.10.0
libtpu: 0.0.40
codegen_flags: <defaults>
</compile_context>

<pallas_src>
import functools

import jax
import jax.numpy as jnp
from jax.experimental import pallas as pl
from jax.experimental.pallas import tpu as pltpu


# ------------------------------- kernels -----------------------------------


def _dtr_kernel_single_k(x_ref, w_ref, b_ref, o_ref, *, reps):
    """Single K step:  o = x @ W - bias_proj  (bias folded to the output side)."""
    acc = jnp.dot(x_ref[...], w_ref[...], preferred_element_type=jnp.float32)
    b = b_ref[...]
    if reps > 1:                        # length-L bias period replicated to TM rows
        b = jnp.tile(b, (reps, 1))
    o_ref[...] = (acc - b).astype(o_ref.dtype)


def _dtr_kernel_multi_k(x_ref, w_ref, b_ref, o_ref, acc_ref, *, reps):
    """K-tiled variant with an fp32 VMEM accumulator (very large D_in only)."""
    k = pl.program_id(2)

    @pl.when(k == 0)
    def _():
        acc_ref[...] = jnp.zeros_like(acc_ref)

    acc_ref[...] += jnp.dot(x_ref[...], w_ref[...],
                            preferred_element_type=jnp.float32)

    @pl.when(k == pl.num_programs(2) - 1)
    def _():
        b = b_ref[...]
        if reps > 1:
            b = jnp.tile(b, (reps, 1))
        o_ref[...] = (acc_ref[...] - b).astype(o_ref.dtype)


# --------------------------- tile-size selection ----------------------------


def _cdiv(a, b):
    return -(-a // b)


def _vmem_capacity_bytes():
    """Physical VMEM per TensorCore (128 MiB v5e/v6e, 64 MiB v7x)."""
    try:
        return int(pltpu.get_tpu_info().vmem_capacity_bytes)
    except Exception:
        return 64 << 20                 # conservative default (v7x-sized)


def _pick_feat_tile(D, cap):
    """Feature-dim tile: full dim if small / not 128-aligned; otherwise the
    largest 256-multiple divisor <= cap (MXU width on v6e/v7x, also fine on
    v5e's 128x128 MXUs), falling back to 128-multiples."""
    if D <= cap or D % 128 != 0:
        return D
    for step in (256, 128):
        t = cap - cap % step
        while t >= step:
            if D % t == 0:
                return t
            t -= step
    return D


def _pick_tm(M, L, tm_cap):
    """M-tile size (rows of the flattened (B*L, D_in) input)."""
    tm_cap = max(8, tm_cap)
    if M <= tm_cap:
        return M                                    # single tile (full dim)
    B = M // L
    # Whole-sequence tiles: TM = L * g with g | B (largest first).
    for g in range(min(B, tm_cap // L), 0, -1):
        if B % g == 0 and (L * g) % 8 == 0:
            return L * g
    # Intra-sequence tiles: TM | L and a sublane multiple.
    t = min(L, tm_cap) // 8 * 8
    while t >= 8:
        if L % t == 0:
            return t
        t -= 8
    # Period-agnostic: largest multiple of 8 dividing M (bias gets broadcast).
    t = min(M, tm_cap) // 8 * 8
    while t >= 8:
        if M % t == 0:
            return t
        t -= 8
    # Last resort: ragged edge tile (Pallas masks the partial block).
    return max(8, min(tm_cap, M) // 8 * 8)


# -------------------------------- wrapper -----------------------------------


def dtr_layer(x, bias, weight, *, dropout_p=0.0, _force_tk=None):
    """out = Linear_no_bias(dropout_{p}(x) - bias)  (p must be 0 here).

    x:      (B, L, D_in)
    bias:   (1, L, D_in)    learned positional bias
    weight: (D_out, D_in)   torch nn.Linear layout, bias=False
    """
    # TODO(synk): stochastic dropout (p>0, training) needs pltpu.prng_seed with
    #             a grid-step-dependent seed + pltpu.prng_random_bits masking.
    assert dropout_p == 0.0, "only the p=0 (identity) dropout path is implemented"

    B, L, D_in = x.shape
    D_out, d_in_w = weight.shape
    assert d_in_w == D_in and bias.shape == (1, L, D_in)
    M = B * L

    x2d = x.reshape(M, D_in)                        # free row-major reshape

    # One-time tiny wrapper-side ops (negligible vs. the x HBM read):
    w_t = jnp.transpose(weight)                     # (D_in, D_out): no in-kernel transpose
    bias_proj = jnp.dot(bias.reshape(L, D_in).astype(jnp.float32),
                        w_t.astype(jnp.float32))    # (L, D_out) fp32 output-side correction

    # ------------------- generation-aware tile selection -------------------
    itemsize = jnp.dtype(x.dtype).itemsize
    vmem_cap = _vmem_capacity_bytes()
    budget = int(vmem_cap * 0.4)                    # tile bytes incl. double buffering

    TN = _pick_feat_tile(D_out, cap=1024)

    if _force_tk is not None:
        TK = int(_force_tk)
    else:
        # Prefer TK == D_in (single K step): x and W are then each read from
        # HBM exactly once and the accumulator scratch disappears.
        probe = 2 * itemsize * (8 * D_in + D_in * TN + 8 * TN + min(8, L) * TN)
        TK = D_in if probe <= budget else _pick_feat_tile(D_in, cap=512)
    assert D_in % TK == 0
    k_tiled = TK < D_in

    per_row = 2 * itemsize * (TK + 2 * TN) + (4 * TN if k_tiled else 0)
    fixed = 2 * itemsize * TK * TN                  # weight tile, double-buffered
    tm_cap = min(2048, max(8, (budget - fixed) // per_row))
    TM = _pick_tm(M, L, tm_cap)

    n_tiles = _cdiv(D_out, TN)
    m_tiles = _cdiv(M, TM)
    # Keep >= 2 steps on the parallel grid when possible so both v7x
    # TensorCores get work (one extra ~0.35us step, harmless on 1-TC chips).
    if m_tiles == 1 and n_tiles == 1 and TM >= 16 and (TM // 2) % 8 == 0:
        TM //= 2
        m_tiles = _cdiv(M, TM)

    # ---------------------- bias-projection blocking ------------------------
    # Case A: sequence-aligned tiles -> replicate the (L, TN) block in-kernel.
    # Case B: intra-sequence tiles   -> block bias_proj by position.
    # Case C: tile doesn't align with the length-L period -> broadcast the tiny
    #         (L, D_out) projection to (M, D_out) once on the host side.
    if TM % L == 0 and L % 8 == 0 and M % TM == 0:
        bias_arr, TB, reps = bias_proj, L, TM // L
        bias_idx2 = lambda i, j: (0, j)
    elif TM <= L and L % TM == 0 and M % TM == 0:
        bias_arr, TB, reps = bias_proj, TM, 1
        nb = L // TM
        bias_idx2 = lambda i, j: (i % nb, j)
    else:
        bias_arr = jnp.broadcast_to(bias_proj[None], (B, L, D_out)).reshape(M, D_out)
        TB, reps = TM, 1
        bias_idx2 = lambda i, j: (i, j)

    # ------------------------------ pallas_call -----------------------------
    out_shape = jax.ShapeDtypeStruct((M, D_out), x.dtype)
    vmem_limit = int(vmem_cap * 0.7)

    if not k_tiled:
        grid_spec = pltpu.PrefetchScalarGridSpec(
            num_scalar_prefetch=0,
            grid=(m_tiles, n_tiles),
            in_specs=[
                pl.BlockSpec((TM, TK), lambda i, j: (i, 0)),
                pl.BlockSpec((TK, TN), lambda i, j: (0, j)),
                pl.BlockSpec((TB, TN), bias_idx2),
            ],
            out_specs=pl.BlockSpec((TM, TN), lambda i, j: (i, j)),
        )
        kernel = functools.partial(_dtr_kernel_single_k, reps=reps)
        dim_sem = ("parallel", "parallel")
    else:
        grid_spec = pltpu.PrefetchScalarGridSpec(
            num_scalar_prefetch=0,
            grid=(m_tiles, n_tiles, D_in // TK),
            in_specs=[
                pl.BlockSpec((TM, TK), lambda i, j, k: (i, k)),
                pl.BlockSpec((TK, TN), lambda i, j, k: (k, j)),
                pl.BlockSpec((TB, TN), lambda i, j, k: bias_idx2(i, j)),
            ],
            out_specs=pl.BlockSpec((TM, TN), lambda i, j, k: (i, j)),
            scratch_shapes=[pltpu.VMEM((TM, TN), jnp.float32)],
        )
        kernel = functools.partial(_dtr_kernel_multi_k, reps=reps)
        dim_sem = ("parallel", "parallel", "arbitrary")

    out2d = pl.pallas_call(
        kernel,
        out_shape=out_shape,
        grid_spec=grid_spec,
        compiler_params=pltpu.CompilerParams(
            dimension_semantics=dim_sem,
            vmem_limit_bytes=vmem_limit),
    )(x2d, w_t, bias_arr)

    return out2d.reshape(B, L, D_out)


def dtr_reference(x, bias, weight):
    # Pure-JAX reference (dropout p=0 is identity).
    return jnp.einsum("bld,od->blo", x - bias, weight)


# --------------------------------- tests ------------------------------------


def _run_case(name, B, L, D_in, D_out, seed, tol, **kw):
    kx, kw_, kb = jax.random.split(jax.random.PRNGKey(seed), 3)
    x = jax.random.normal(kx, (B, L, D_in), dtype=jnp.float32)
    # The module initializes the bias to zeros; use a NONZERO bias so the
    # (x - bias) path is genuinely exercised against the reference.
    bias = 0.1 * jax.random.normal(kb, (1, L, D_in), dtype=jnp.float32)
    weight = 0.02 * jax.random.normal(kw_, (D_out, D_in), dtype=jnp.float32)

    out = jax.block_until_ready(dtr_layer(x, bias, weight, **kw))
    ref = dtr_reference(x, bias, weight)
    assert out.shape == (B, L, D_out), name
    assert jnp.allclose(out, ref, atol=tol, rtol=tol), f"mismatch vs reference: {name}"


if __name__ == "__main__":
    # Primary: small shapes consistent with the module (single-K fast path).
    _run_case("small", B=2, L=8, D_in=32, D_out=32, seed=0, tol=1e-5)
    # K-tiled accumulator path (TK forced below D_in to exercise the reduction).
    _run_case("k_tiled", B=2, L=8, D_in=1024, D_out=256, seed=1, tol=1e-4,
              _force_tk=256)
    # Module-default max_seq_length=50 (bias period not sublane-aligned ->
    # broadcast-bias path) with multiple M tiles.
    _run_case("seq50", B=48, L=50, D_in=64, D_out=64, seed=2, tol=1e-4)
    print("KERNEL_OK")
</pallas_src>

<mosaic_0001>
module attributes {stable_mosaic.version = 11 : i64} {
  func.func @_dtr_kernel_single_k(%arg0: i32, %arg1: i32, %arg2: memref<8x32xf32, #tpu.memory_space<vmem>>, %arg3: memref<32x32xf32, #tpu.memory_space<vmem>>, %arg4: memref<8x32xf32, #tpu.memory_space<vmem>>, %arg5: memref<8x32xf32, #tpu.memory_space<vmem>>) attributes {dimension_semantics = [#tpu.dimension_semantics<parallel>, #tpu.dimension_semantics<parallel>], iteration_bounds = array<i64: 2, 1>, scalar_prefetch = 0 : i64, scratch_operands = 0 : i64, tpu.core_type = #tpu.core_type<tc>, window_params = [{transform_indices = @transform_0, window_bounds = array<i64: 8, 32>}, {transform_indices = @transform_1, window_bounds = array<i64: 32, 32>}, {transform_indices = @transform_2, window_bounds = array<i64: 8, 32>}, {transform_indices = @transform_3, window_bounds = array<i64: 8, 32>}]} {
    %c0 = arith.constant 0 : index
    %c0_0 = arith.constant 0 : index
    %0 = vector.load %arg2[%c0, %c0_0] : memref<8x32xf32, #tpu.memory_space<vmem>>, vector<8x32xf32>
    %c0_1 = arith.constant 0 : index
    %c0_2 = arith.constant 0 : index
    %1 = vector.load %arg3[%c0_1, %c0_2] : memref<32x32xf32, #tpu.memory_space<vmem>>, vector<32x32xf32>
    %cst = arith.constant dense<0.000000e+00> : vector<8x32xf32>
    %2 = tpu.matmul %0, %1, %cst {dimension_numbers = #tpu.dot_dimension_numbers<[1], [0], [0], [1], [0, 0, 1, 1], [], []>} : vector<8x32xf32>, vector<32x32xf32>, vector<8x32xf32> -> vector<8x32xf32>
    %c0_3 = arith.constant 0 : index
    %c0_4 = arith.constant 0 : index
    %3 = vector.load %arg4[%c0_3, %c0_4] : memref<8x32xf32, #tpu.memory_space<vmem>>, vector<8x32xf32>
    %4 = arith.subf %2, %3 : vector<8x32xf32>
    %c0_5 = arith.constant 0 : index
    %c0_6 = arith.constant 0 : index
    %5 = vector.load %arg5[%c0_5, %c0_6] : memref<8x32xf32, #tpu.memory_space<vmem>>, vector<8x32xf32>
    tpu.vector_store %arg5[%c0_5, %c0_6], %4 {strides = array<i32>} : memref<8x32xf32, #tpu.memory_space<vmem>>, vector<8x32xf32>,
    return
  }
  func.func @transform_0(%arg0: i32, %arg1: i32) -> (i32, i32) {
    %c0_i32 = arith.constant 0 : i32
    %c0_i32_0 = arith.constant 0 : i32
    return %arg0, %c0_i32 : i32, i32
  }
  func.func @transform_1(%arg0: i32, %arg1: i32) -> (i32, i32) {
    %c0_i32 = arith.constant 0 : i32
    %c0_i32_0 = arith.constant 0 : i32
    return %c0_i32, %arg1 : i32, i32
  }
  func.func @transform_2(%arg0: i32, %arg1: i32) -> (i32, i32) {
    %c0_i32 = arith.constant 0 : i32
    %c0_i32_0 = arith.constant 0 : i32
    return %c0_i32, %arg1 : i32, i32
  }
  func.func @transform_3(%arg0: i32, %arg1: i32) -> (i32, i32) {
    %c0_i32 = arith.constant 0 : i32
    return %arg0, %arg1 : i32, i32
  }
}

</mosaic_0001>

<llo_original>
// kernel: tpu_custom_call.1
$region0: #{tpu_custom_call.1}
  #allocation0 [shape = 'u32[]', space=smem, size = 0x4, offset = 0x4, fixed_abs, tag = 'smem constant byte address 0x4 - core index']
  #allocation1 [shape = 'u32[144,128]{1,0:T(1,128)}', space=vmem, size = 0x12000, scoped, tag = 'internal scratch']
  %s0 = inlined_call_operand.hbm [shape: f32[16,32], index: 0, kind: input, shape index: {}]
  %s1 = inlined_call_operand.hbm [shape: f32[32,32], index: 1, kind: input, shape index: {}]
  %s2 = inlined_call_operand.hbm [shape: f32[8,32], index: 2, kind: input, shape index: {}]
  %s3 = inlined_call_operand.hbm [shape: f32[16,32], index: 3, kind: output, shape index: {}]
  %s4 = sld [smem:[#allocation0]]
  $region57: #{tpu_custom_call.1} parent=0
    _
  %s6 = ssub.s32 1, %s4
  %s7 = scalar_select 0, %s6, %s4
  $region1: #{tpu_custom_call.1} parent=0
    #allocation2 [shape = 'u8[8192]{0}', space=vmem, size = 0x2000, scoped, tag = 'input window, operand 0']
    #allocation3 [shape = 's32[2]{0}', space=sflag, size = 0x8, scoped, tag = 'scoped memory for tpu_custom_call.1']
    #allocation4 [shape = 's32[2]{0}', space=sflag, size = 0x8, scoped, tag = 'scoped memory for tpu_custom_call.1']
    #allocation5 [shape = 'u8[16384]{0}', space=vmem, size = 0x4000, scoped, tag = 'input window, operand 1, single buffered']
    #allocation6 [shape = 's32[1]{0}', space=sflag, size = 0x4, scoped, tag = 'scoped memory for tpu_custom_call.1']
    #allocation7 [shape = 'u8[4096]{0}', space=vmem, size = 0x1000, scoped, tag = 'input window, operand 2, single buffered']
    #allocation8 [shape = 'u8[8192]{0}', space=vmem, size = 0x2000, scoped, tag = 'output window, operand 0']
    %8 = vsyncpa [#allocation3], 0
    %s9 = scalar_lea.sflag [#allocation3], 1
    %10 = vsyncpa %s9, 0
    %11 = vsyncpa [#allocation6], 0
    %12 = vsyncpa [#allocation4], 0
    %s13 = scalar_lea.sflag [#allocation4], 1
    %14 = vsyncpa %s13, 0
    loop: start=0, step=1, limit=4
    $region2: #{tpu_custom_call.1} parent=1 // loop_pre_header
      _
    $region3: #{tpu_custom_call.1} parent=1 // loop_header
      %s16 = sphi 0, %s20
      %p17 = scmp.ge.s32.totalorder %s16, 4
      %s23 = sphi 0, %s35
      %s24 = sphi 0, %s31
      %s25 = sphi 0, %s23
      %s26 = sphi 0, %s24
      %s27 = sphi 0, %s25
      %s28 = sphi 0, %s26
      %s38 = sphi 0, %s40
      %s41 = sphi 0, %s38
      %s42 = sphi 0, %s41
      %s58 = sphi 0, %s42
      %s64 = sphi 0, %s66
      %s67 = sphi 0, %s64
      %s68 = sphi 0, %s67
      %s84 = sphi 0, %s68
      %s90 = sphi 0, %s92
      %s93 = sphi 0, %s90
      %s94 = sphi 0, %s93
      %s110 = sphi 0, %s94
      %s118 = sphi 0, %s120
      %s121 = sphi 0, %s118
      %s122 = sphi 0, %s121
      %s138 = sphi 0, %s122
    $region4: #{tpu_custom_call.1} parent=1 // loop_header_branch
      %19 = sbr.rel (%p17) target = $region8
    $region5: #{tpu_custom_call.1} parent=1 // loop_body
      %s21 = ssub.s32 %s16, 1
      %s22 = ssub.s32 %s16, 2
      %s29 = sadd.s32 1, %s24
      %p30 = scmp.ge.s32.totalorder %s29, 1
      %s31 = scalar_select %p30, 0, %s29
      %s32 = sadd.s32 1, %s23
      %s33 = scalar_select %p30, %s32, %s23
      %p34 = scmp.ge.s32.totalorder %s33, 2
      %s35 = scalar_select %p34, 0, %s33
      %s36 = ssub.s32 %s23, %s35
      %p37 = scmp.eq.s32.totalorder %s36, 0
      %s39 = sadd.s32 %s38, 1
      %s40 = scalar_select %p37, %s38, %s39
      %p43 = pneg %p37
      %p44 = scmp.eq.s32.totalorder %s16, 1
      %p45 = por %p43, %p44
      %p46 = scmp.ne.s32.totalorder %s38, %s41
      %p47 = scmp.eq.s32.totalorder %s16, 0
      %p48 = por %p46, %p47
      %p49 = scmp.ne.s32.totalorder %s38, %s41
      %p50 = scmp.eq.s32.totalorder %s21, 1
      %p51 = por %p49, %p50
      %p52 = scmp.ne.s32.totalorder %s41, %s42
      %p53 = scmp.eq.s32.totalorder %s21, 0
      %p54 = por %p52, %p53
      %p55 = scmp.ne.s32.totalorder %s41, %s42
      %p56 = scmp.eq.s32.totalorder %s22, 1
      %p57 = por %p55, %p56
      %p59 = scmp.ne.s32.totalorder %s42, %s58
      %p60 = scmp.eq.s32.totalorder %s22, 0
      %p61 = por %p59, %p60
      %s62 = ssub.s32 %s24, %s31
      %p63 = scmp.eq.s32.totalorder %s62, 0
      %s65 = sadd.s32 %s64, 1
      %s66 = scalar_select %p63, %s64, %s65
      %p69 = pneg %p63
      %p70 = scmp.eq.s32.totalorder %s16, 1
      %p71 = por %p69, %p70
      %p72 = scmp.ne.s32.totalorder %s64, %s67
      %p73 = scmp.eq.s32.totalorder %s16, 0
      %p74 = por %p72, %p73
      %p75 = scmp.ne.s32.totalorder %s64, %s67
      %p76 = scmp.eq.s32.totalorder %s21, 1
      %p77 = por %p75, %p76
      %p78 = scmp.ne.s32.totalorder %s67, %s68
      %p79 = scmp.eq.s32.totalorder %s21, 0
      %p80 = por %p78, %p79
      %p81 = scmp.ne.s32.totalorder %s67, %s68
      %p82 = scmp.eq.s32.totalorder %s22, 1
      %p83 = por %p81, %p82
      %p85 = scmp.ne.s32.totalorder %s68, %s84
      %p86 = scmp.eq.s32.totalorder %s22, 0
      %p87 = por %p85, %p86
      %s88 = ssub.s32 %s24, %s31
      %p89 = scmp.eq.s32.totalorder %s88, 0
      %s91 = sadd.s32 %s90, 1
      %s92 = scalar_select %p89, %s90, %s91
      %p95 = pneg %p89
      %p96 = scmp.eq.s32.totalorder %s16, 1
      %p97 = por %p95, %p96
      %p98 = scmp.ne.s32.totalorder %s90, %s93
      %p99 = scmp.eq.s32.totalorder %s16, 0
      %p100 = por %p98, %p99
      %p101 = scmp.ne.s32.totalorder %s90, %s93
      %p102 = scmp.eq.s32.totalorder %s21, 1
      %p103 = por %p101, %p102
      %p104 = scmp.ne.s32.totalorder %s93, %s94
      %p105 = scmp.eq.s32.totalorder %s21, 0
      %p106 = por %p104, %p105
      %p107 = scmp.ne.s32.totalorder %s93, %s94
      %p108 = scmp.eq.s32.totalorder %s22, 1
      %p109 = por %p107, %p108
      %p111 = scmp.ne.s32.totalorder %s94, %s110
      %p112 = scmp.eq.s32.totalorder %s22, 0
      %p113 = por %p111, %p112
      %s114 = ssub.s32 %s23, %s35
      %s115 = ssub.s32 %s24, %s31
      %s116 = sor.u32 %s114, %s115
      %p117 = scmp.eq.s32.totalorder %s116, 0
      %s119 = sadd.s32 %s118, 1
      %s120 = scalar_select %p117, %s118, %s119
      %p123 = pneg %p117
      %p124 = scmp.eq.s32.totalorder %s16, 1
      %p125 = por %p123, %p124
      %p126 = scmp.ne.s32.totalorder %s118, %s121
      %p127 = scmp.eq.s32.totalorder %s16, 0
      %p128 = por %p126, %p127
      %p129 = scmp.ne.s32.totalorder %s118, %s121
      %p130 = scmp.eq.s32.totalorder %s21, 1
      %p131 = por %p129, %p130
      %p132 = scmp.ne.s32.totalorder %s121, %s122
      %p133 = scmp.eq.s32.totalorder %s21, 0
      %p134 = por %p132, %p133
      %p135 = scmp.ne.s32.totalorder %s121, %s122
      %p136 = scmp.eq.s32.totalorder %s22, 1
      %p137 = por %p135, %p136
      %p139 = scmp.ne.s32.totalorder %s122, %s138
      %p140 = scmp.eq.s32.totalorder %s22, 0
      %p141 = por %p139, %p140
      %p142 = scmp.le.s32.totalorder 1, %s16
      %p143 = scmp.lt.s32.totalorder %s16, 3
      %p144 = pnand %p142, %p143
      %p145 = pneg %p144
      // Predicated region
      $region9: #{tpu_custom_call.1} parent=5 // pred_check
        _
      $region10: #{tpu_custom_call.1} parent=5 // pred_check_branch
        %147 = sbr.rel (%p144) target = $region12
      $region11: #{tpu_custom_call.1} parent=5 // pred_region
        %s148 = ssub.s32 %s16, 1
        // Predicated region
        $region13: #{tpu_custom_call.1} parent=11 // pred_check
          %p149 = pneg %p80
        $region14: #{tpu_custom_call.1} parent=11 // pred_check_branch
          %151 = sbr.rel (%p149) target = $region16
        $region15: #{tpu_custom_call.1} parent=11 // pred_region
          %s153 = ssub.s32 512, 512
          %154 = vsyncadd [#allocation6], %s153
          %s155 = smul.addr %s26, 128
          %s156 = scalar_lea.hbm %s1, %s155
          %s157 = sshll.u32 [#allocation5], 4
          %s158 = int_to_ptr.vmem [resolvable:$true] %s157
          %163 = dma.hbm_to_vmem [thread:$0]  %s156, 512, %s158, [#allocation6], 128, 128, 8
        $region16: #{tpu_custom_call.1} parent=11 // pred_fallthru
          _
        // Predicated region
        $region17: #{tpu_custom_call.1} parent=11 // pred_check
          %p164 = pneg %p106
        $region18: #{tpu_custom_call.1} parent=11 // pred_check_branch
          %166 = sbr.rel (%p164) target = $region20
        $region19: #{tpu_custom_call.1} parent=11 // pred_region
          %s168 = ssub.s32 128, 128
          %169 = vsyncadd [#allocation6], %s168
          %s170 = smul.addr %s26, 128
          %s171 = scalar_lea.hbm %s2, %s170
          %s173 = sshll.u32 [#allocation7], 4
          %s174 = int_to_ptr.vmem [resolvable:$true] %s173
          %176 = dma.hbm_to_vmem [thread:$0]  %s171, 128, %s174, [#allocation6]
        $region20: #{tpu_custom_call.1} parent=11 // pred_fallthru
          _
      $region12: #{tpu_custom_call.1} parent=5 // pred_fallthru
        _
      %p177 = scmp.lt.s32.totalorder %s16, 2
      // Predicated region
      $region21: #{tpu_custom_call.1} parent=5 // pred_check
        %p178 = pneg %p177
      $region22: #{tpu_custom_call.1} parent=5 // pred_check_branch
        %180 = sbr.rel (%p178) target = $region24
      $region23: #{tpu_custom_call.1} parent=5 // pred_region
        // Predicated region
        $region25: #{tpu_custom_call.1} parent=23 // pred_check
          %p181 = pneg %p48
        $region26: #{tpu_custom_call.1} parent=23 // pred_check_branch
          %183 = sbr.rel (%p181) target = $region28
        $region27: #{tpu_custom_call.1} parent=23 // pred_region
          %s184 = sand.u32 %s38, 1
          %s185 = scalar_lea.sflag [#allocation3], %s184
          %s186 = sand.u32 %s38, 1
          %s187 = smul.addr %s186, 8
          %s188 = scalar_lea.vmem [#allocation2], %s187
          %s190 = ssub.s32 128, 128
          %191 = vsyncadd %s185, %s190
          %s192 = smul.addr %s23, 128
          %s193 = scalar_lea.hbm %s0, %s192
          %s195 = sshll.u32 %s188, 4
          %s196 = int_to_ptr.vmem [resolvable:$true] %s195
          %198 = dma.hbm_to_vmem [thread:$0]  %s193, 128, %s196, %s185
        $region28: #{tpu_custom_call.1} parent=23 // pred_fallthru
          _
      $region24: #{tpu_custom_call.1} parent=5 // pred_fallthru
        _
      %p199 = scmp.le.s32.totalorder 1, %s16
      %p200 = scmp.lt.s32.totalorder %s16, 3
      %p201 = pnand %p199, %p200
      %p202 = pneg %p201
      // Predicated region
      $region29: #{tpu_custom_call.1} parent=5 // pred_check
        _
      $region30: #{tpu_custom_call.1} parent=5 // pred_check_branch
        %204 = sbr.rel (%p201) target = $region32
      $region31: #{tpu_custom_call.1} parent=5 // pred_region
        %s205 = ssub.s32 %s16, 1
        %s206 = sand.u32 %s41, 1
        %s207 = scalar_lea.sflag [#allocation3], %s206
        %s208 = sand.u32 %s41, 1
        %s209 = smul.addr %s208, 8
        %s210 = scalar_lea.vmem [#allocation2], %s209
        // Predicated region
        $region33: #{tpu_custom_call.1} parent=31 // pred_check
          %p211 = pneg %p54
        $region34: #{tpu_custom_call.1} parent=31 // pred_check_branch
          %213 = sbr.rel (%p211) target = $region36
        $region35: #{tpu_custom_call.1} parent=31 // pred_region
          %214 = dma.done %s207, 128
        $region36: #{tpu_custom_call.1} parent=31 // pred_fallthru
          _
        // Predicated region
        $region37: #{tpu_custom_call.1} parent=31 // pred_check
          %p215 = pneg %p80
        $region38: #{tpu_custom_call.1} parent=31 // pred_check_branch
          %217 = sbr.rel (%p215) target = $region40
        $region39: #{tpu_custom_call.1} parent=31 // pred_region
          %218 = dma.done [#allocation6], 512
        $region40: #{tpu_custom_call.1} parent=31 // pred_fallthru
          _
        // Predicated region
        $region41: #{tpu_custom_call.1} parent=31 // pred_check
          %p219 = pneg %p106
        $region42: #{tpu_custom_call.1} parent=31 // pred_check_branch
          %221 = sbr.rel (%p219) target = $region44
        $region43: #{tpu_custom_call.1} parent=31 // pred_region
          %222 = dma.done [#allocation6], 128
        $region44: #{tpu_custom_call.1} parent=31 // pred_fallthru
          _
        %s223 = sand.u32 %s41, 1
        %s224 = scalar_lea.sflag [#allocation3], %s223
        %s225 = sand.u32 %s41, 1
        %s226 = smul.addr %s225, 8
        %s227 = scalar_lea.vmem [#allocation2], %s226
        %p228 = pneg %p54
        %p229 = pneg %p51
        %p230 = pneg %p80
        %p231 = pneg %p77
        %p232 = pneg %p106
        %p233 = pneg %p103
        %p234 = pneg %p134
        %p235 = pneg %p131
        %s236 = sand.u32 %s121, 1
        %s237 = scalar_lea.sflag [#allocation4], %s236
        %s238 = sand.u32 %s121, 1
        %s239 = smul.addr %s238, 8
        %s240 = scalar_lea.vmem [#allocation8], %s239
        %v241 = vld [vmem:[%s210] sm:$0xff]
        %v242 = vld [vmem:[#allocation5] sm:$0xff]
        %v243 = vld [vmem:[#allocation5 + $0x8] sm:$0xff]
        %v244 = vld [vmem:[#allocation5 + $0x10] sm:$0xff]
        %v245 = vld [vmem:[#allocation5 + $0x18] sm:$0xff]
        %vm246 = vcmask 261120
        %v248 = vsel %vm246, %v241, 0
        %250 = vmatprep.subr.mxu0 0.0
        %251 = vmatpush1.msra.mxu0 %v242
        %252 = vmatprep.subr.mxu0 0.0
        %253 = vmatpush1.msra.mxu0 %v243
        %254 = vmatprep.subr.mxu0 0.0
        %255 = vmatpush1.msra.mxu0 %v244
        %256 = vmatprep.subr.mxu0 0.0
        %257 = vmatpush1.msra.mxu0 %v245
        %258 = vmatprep.subr.mxu0 0.0
        %259 = vmatpush1.msra.mxu0 0.0
        %260 = vmatprep.subr.mxu0 0.0
        %261 = vmatpush1.msra.mxu0 0.0
        %262 = vmatprep.subr.mxu0 0.0
        %263 = vmatpush1.msra.mxu0 0.0
        %264 = vmatprep.subr.mxu0 0.0
        %265 = vmatpush1.msra.mxu0 0.0
        %266 = vmatprep.subr.mxu0 0.0
        %267 = vmatpush1.msra.mxu0 0.0
        %268 = vmatprep.subr.mxu0 0.0
        %269 = vmatpush1.msra.mxu0 0.0
        %270 = vmatprep.subr.mxu0 0.0
        %271 = vmatpush1.msra.mxu0 0.0
        %272 = vmatprep.subr.mxu0 0.0
        %273 = vmatpush1.msra.mxu0 0.0
        %274 = vmatprep.subr.mxu0 0.0
        %275 = vmatpush1.msra.mxu0 0.0
        %276 = vmatprep.subr.mxu0 0.0
        %277 = vmatpush1.msra.mxu0 0.0
        %278 = vmatprep.subr.mxu0 0.0
        %279 = vmatpush1.msra.mxu0 0.0
        %280 = vmatprep.subr.mxu0 0.0
        %281 = vmatpush1.msra.mxu0 0.0
        %282 = vmatprep.subr.mxu0 0.0
        %283 = vmatpush1.msra.mxu0 0.0
        %284 = vmatprep.subr.mxu0 0.0
        %285 = vmatpush1.msra.mxu0 0.0
        %286 = vmatprep.subr.mxu0 0.0
        %287 = vmatpush1.msra.mxu0 0.0
        %288 = vmatprep.subr.mxu0 0.0
        %289 = vmatpush1.msra.mxu0 0.0
        %290 = vmatprep.subr.mxu0 0.0
        %291 = vmatpush1.msra.mxu0 0.0
        %292 = vmatprep.subr.mxu0 0.0
        %293 = vmatpush1.msra.mxu0 0.0
        %294 = vmatprep.subr.mxu0 0.0
        %295 = vmatpush1.msra.mxu0 0.0
        %296 = vmatprep.subr.mxu0 0.0
        %297 = vmatpush1.msra.mxu0 0.0
        %298 = vmatprep.subr.mxu0 0.0
        %299 = vmatpush1.msra.mxu0 0.0
        %300 = vmatprep.subr.mxu0 0.0
        %301 = vmatpush1.msra.mxu0 0.0
        %302 = vmatprep.subr.mxu0 0.0
        %303 = vmatpush1.msra.mxu0 0.0
        %304 = vmatprep.subr.mxu0 0.0
        %305 = vmatpush1.msra.mxu0 0.0
        %306 = vmatprep.subr.mxu0 0.0
        %307 = vmatpush1.msra.mxu0 0.0
        %308 = vmatprep.subr.mxu0 0.0
        %309 = vmatpush1.msra.mxu0 0.0
        %310 = vmatprep.subr.mxu0 0.0
        %311 = vmatpush1.msra.mxu0 0.0
        %312 = vmatprep.subr.mxu0 0.0
        %313 = vmatpush1.msra.mxu0 0.0
        %314 = vmatprep.mubr.f32.mxu0 0.0
        %315 = vmatmul.mubr.f32.gmra.mrb[0].mxu0 %v248
        %v316 = vpop.f32.mrb[0].mxu0
        %v317 = vadd.f32 0.0, %v316
        %v318 = vpop.f32.mrb[0].mxu0
        %319 = vdwg.mxu0
        %v320 = vld [vmem:[#allocation7] sm:$0xff]
        %v321 = vsub.f32 %v317, %v320
        %322 = vst.msk [vmem:[%s240] sm:$0xff] %vm246, %v321
        %s323 = sand.u32 %s121, 1
        %s324 = scalar_lea.sflag [#allocation4], %s323
        %s325 = sand.u32 %s121, 1
        %s326 = smul.addr %s325, 8
        %s327 = scalar_lea.vmem [#allocation8], %s326
        // Predicated region
        $region45: #{tpu_custom_call.1} parent=31 // pred_check
          %p328 = pneg %p131
        $region46: #{tpu_custom_call.1} parent=31 // pred_check_branch
          %330 = sbr.rel (%p328) target = $region48
        $region47: #{tpu_custom_call.1} parent=31 // pred_region
          %s332 = ssub.s32 128, 128
          %333 = vsyncadd %s324, %s332
          %s334 = sadd.s32 %s26, %s25
          %s335 = smul.addr %s334, 128
          %s336 = scalar_lea.hbm %s3, %s335
          %s338 = sshll.u32 %s327, 4
          %s339 = int_to_ptr.vmem [resolvable:$true] %s338
          %341 = dma.vmem_to_hbm [thread:$0]  %s339, 128, %s336, %s324
        $region48: #{tpu_custom_call.1} parent=31 // pred_fallthru
          _
      $region32: #{tpu_custom_call.1} parent=5 // pred_fallthru
        _
      %p342 = scmp.le.s32.totalorder 2, %s16
      // Predicated region
      $region49: #{tpu_custom_call.1} parent=5 // pred_check
        %p343 = pneg %p342
      $region50: #{tpu_custom_call.1} parent=5 // pred_check_branch
        %345 = sbr.rel (%p343) target = $region52
      $region51: #{tpu_custom_call.1} parent=5 // pred_region
        %s346 = ssub.s32 %s16, 2
        // Predicated region
        $region53: #{tpu_custom_call.1} parent=51 // pred_check
          %p347 = pneg %p137
        $region54: #{tpu_custom_call.1} parent=51 // pred_check_branch
          %349 = sbr.rel (%p347) target = $region56
        $region55: #{tpu_custom_call.1} parent=51 // pred_region
          %s350 = sand.u32 %s122, 1
          %s351 = scalar_lea.sflag [#allocation4], %s350
          %s352 = sand.u32 %s122, 1
          %s353 = smul.addr %s352, 8
          %s354 = scalar_lea.vmem [#allocation8], %s353
          %355 = dma.done %s351, 128
        $region56: #{tpu_custom_call.1} parent=51 // pred_fallthru
          _
      $region52: #{tpu_custom_call.1} parent=5 // pred_fallthru
        _
    $region6: #{tpu_custom_call.1} parent=1 // loop_footer
      %s20 = sadd.s32 1, %s16
    $region7: #{tpu_custom_call.1} parent=1 // loop_footer_branch
      %15 = sbr.rel target = $region3
    $region8: #{tpu_custom_call.1} parent=1 // loop_exit
      _
    %356 = vsyncpa [#allocation3], 1
    %s357 = scalar_lea.sflag [#allocation3], 1
    %358 = vsyncpa %s357, 1
    %359 = vsyncpa [#allocation6], 1
    %360 = vsyncpa [#allocation4], 1
    %s361 = scalar_lea.sflag [#allocation4], 1
    %362 = vsyncpa %s361, 1

</llo_original>
